<compile_context>
chip_gen: v5e
topology: v5e:2x2
jax: 0.10.0
libtpu: 0.0.40
codegen_flags: <defaults>
</compile_context>

<pallas_src>
import functools
import math

import jax
import jax.numpy as jnp
from jax.experimental import pallas as pl
from jax.experimental.pallas import tpu as pltpu

NUM_VIEWS = 6  # module-level constant `num_views = 6` in the reference code

# Above the 32 MiB scoped default (v6e), below v7x's 64 MiB physical VMEM.
VMEM_LIMIT_BYTES = 48 * 1024 * 1024


def _pick_tile(n, candidates=(512, 256, 128)):
    """Largest tile in `candidates` dividing n, else full extent."""
    for c in candidates:
        if n % c == 0:
            return c
    return n


# ----------------------------------------------------------------------------
# Linear kernels (bf16 MXU inputs, f32 accumulation, optional fused residual)
# ----------------------------------------------------------------------------
def _linear_kernel(x_ref, w_ref, b_ref, o_ref):
    acc = jnp.dot(x_ref[...].astype(jnp.bfloat16),
                  w_ref[...].astype(jnp.bfloat16),
                  preferred_element_type=jnp.float32)
    o_ref[...] = (acc + b_ref[...].astype(jnp.float32)).astype(o_ref.dtype)


def _linear_res_kernel(x_ref, w_ref, b_ref, res_ref, o_ref):
    acc = jnp.dot(x_ref[...].astype(jnp.bfloat16),
                  w_ref[...].astype(jnp.bfloat16),
                  preferred_element_type=jnp.float32)
    acc = acc + b_ref[...].astype(jnp.float32) + res_ref[...].astype(jnp.float32)
    o_ref[...] = acc.astype(o_ref.dtype)


def linear(x, w, b, residual=None):
    """y = x @ W + b (+ residual).  W stored (in, out) == torch W^T."""
    K = x.shape[-1]
    N = w.shape[1]
    lead = x.shape[:-1]
    x2 = x.reshape(-1, K)
    M = x2.shape[0]
    tm = _pick_tile(M)
    tn = _pick_tile(N)
    grid = (M // tm, N // tn)

    in_specs = [
        pl.BlockSpec((tm, K), lambda i, j: (i, 0)),
        pl.BlockSpec((K, tn), lambda i, j: (0, j)),
        pl.BlockSpec((1, tn), lambda i, j: (0, j)),
    ]
    args = [x2, w, b.reshape(1, N)]
    if residual is not None:
        in_specs.append(pl.BlockSpec((tm, tn), lambda i, j: (i, j)))
        args.append(residual.reshape(M, N))
        kern = _linear_res_kernel
    else:
        kern = _linear_kernel

    out = pl.pallas_call(
        kern,
        out_shape=jax.ShapeDtypeStruct((M, N), x.dtype),
        grid_spec=pltpu.PrefetchScalarGridSpec(
            num_scalar_prefetch=0,
            grid=grid,
            in_specs=in_specs,
            out_specs=pl.BlockSpec((tm, tn), lambda i, j: (i, j)),
        ),
        compiler_params=pltpu.CompilerParams(
            dimension_semantics=("parallel", "parallel"),
            vmem_limit_bytes=VMEM_LIMIT_BYTES,
        ),
    )(*args)
    return out.reshape(*lead, N)


def _linear_fused_kernel(x_ref, w_ref, b_ref, *o_refs):
    # One matmul against the fused (K, n_out*N) weight; x is read from HBM once.
    acc = jnp.dot(x_ref[...].astype(jnp.bfloat16),
                  w_ref[...].astype(jnp.bfloat16),
                  preferred_element_type=jnp.float32)
    acc = acc + b_ref[...].astype(jnp.float32)
    n = acc.shape[-1] // len(o_refs)
    for idx, o_ref in enumerate(o_refs):
        o_ref[...] = acc[:, idx * n:(idx + 1) * n].astype(o_ref.dtype)


def linear_fused(x, w, b, num_outputs):
    """Fused projection: x @ [W0|W1|...] + [b0|b1|...] -> num_outputs arrays."""
    K = x.shape[-1]
    Ntot = w.shape[1]
    N = Ntot // num_outputs
    lead = x.shape[:-1]
    x2 = x.reshape(-1, K)
    M = x2.shape[0]
    tm = _pick_tile(M)
    grid = (M // tm,)

    outs = pl.pallas_call(
        _linear_fused_kernel,
        out_shape=tuple(jax.ShapeDtypeStruct((M, N), x.dtype)
                        for _ in range(num_outputs)),
        grid_spec=pltpu.PrefetchScalarGridSpec(
            num_scalar_prefetch=0,
            grid=grid,
            in_specs=[
                pl.BlockSpec((tm, K), lambda i: (i, 0)),
                pl.BlockSpec((K, Ntot), lambda i: (0, 0)),
                pl.BlockSpec((1, Ntot), lambda i: (0, 0)),
            ],
            out_specs=[pl.BlockSpec((tm, N), lambda i: (i, 0))
                       for _ in range(num_outputs)],
        ),
        compiler_params=pltpu.CompilerParams(
            dimension_semantics=("parallel",),
            vmem_limit_bytes=VMEM_LIMIT_BYTES,
        ),
    )(x2, w, b.reshape(1, Ntot))
    return tuple(o.reshape(*lead, N) for o in outs)


# ----------------------------------------------------------------------------
# Flash attention: lane-dense (B, T, C) layout, heads looped in-kernel,
# kv-tiled online softmax, K/V sharing expressed through the index_map.
# ----------------------------------------------------------------------------
def _flash_attn_kernel(q_ref, k_ref, v_ref, o_ref, m_sc, l_sc, acc_sc,
                       *, scale, heads):
    kt = pl.program_id(1)

    @pl.when(kt == 0)
    def _():
        m_sc[...] = jnp.full_like(m_sc, -jnp.inf)
        l_sc[...] = jnp.zeros_like(l_sc)
        acc_sc[...] = jnp.zeros_like(acc_sc)

    qb = q_ref[0].astype(jnp.bfloat16)   # (Tq, C)
    kb = k_ref[0].astype(jnp.bfloat16)   # (tk, C)
    vb = v_ref[0].astype(jnp.bfloat16)   # (tk, C)
    Dh = qb.shape[-1] // heads

    for h in range(heads):
        sl = slice(h * Dh, (h + 1) * Dh)
        qh, kh, vh = qb[:, sl], kb[:, sl], vb[:, sl]
        # s = q @ k^T (MXU, f32 accumulation)
        s = jax.lax.dot_general(
            qh, kh, (((1,), (1,)), ((), ())),
            preferred_element_type=jnp.float32) * scale          # (Tq, tk)
        m_prev = m_sc[h]                                          # (Tq, 1)
        l_prev = l_sc[h]
        m_new = jnp.maximum(m_prev, jnp.max(s, axis=-1, keepdims=True))
        alpha = jnp.exp(m_prev - m_new)
        p = jnp.exp(s - m_new)
        l_sc[h] = alpha * l_prev + jnp.sum(p, axis=-1, keepdims=True)
        acc_sc[h] = alpha * acc_sc[h] + jnp.dot(
            p.astype(jnp.bfloat16), vh, preferred_element_type=jnp.float32)
        m_sc[h] = m_new

    @pl.when(kt == pl.num_programs(1) - 1)
    def _():
        outs = []
        for h in range(heads):
            inv = pl.reciprocal(l_sc[h], approx=True)             # EUP slot
            outs.append(acc_sc[h] * inv)
        full = outs[0] if heads == 1 else jnp.concatenate(outs, axis=-1)
        o_ref[0] = full.astype(o_ref.dtype)                       # dense (Tq, C)


def flash_attention(q, k, v, *, heads, scale, kv_batch_seq_map, n_kv_tiles, tk):
    """q: (B, Tq, C); k, v: (Bkv, Tkv, C).

    kv_batch_seq_map(b, kt) -> (kv_batch_index, kv_seq_block_index) lets the
    DMA re-read shared K/V blocks (MV repeat / joint chunk-cat) without ever
    materializing the duplication in HBM.
    """
    B, Tq, C = q.shape
    Dh = C // heads
    # NOTE: at production scale a Tq-tile grid axis would be added as well;
    # for these shapes a full-Tq block fits comfortably in VMEM.
    kern = functools.partial(_flash_attn_kernel, scale=float(scale), heads=heads)
    return pl.pallas_call(
        kern,
        out_shape=jax.ShapeDtypeStruct((B, Tq, C), q.dtype),
        grid_spec=pltpu.PrefetchScalarGridSpec(
            num_scalar_prefetch=0,
            grid=(B, n_kv_tiles),
            in_specs=[
                pl.BlockSpec((1, Tq, C), lambda b, kt: (b, 0, 0)),
                pl.BlockSpec((1, tk, C),
                             lambda b, kt: (*kv_batch_seq_map(b, kt), 0)),
                pl.BlockSpec((1, tk, C),
                             lambda b, kt: (*kv_batch_seq_map(b, kt), 0)),
            ],
            out_specs=pl.BlockSpec((1, Tq, C), lambda b, kt: (b, 0, 0)),
            scratch_shapes=[
                pltpu.VMEM((heads, Tq, 1), jnp.float32),   # running max
                pltpu.VMEM((heads, Tq, 1), jnp.float32),   # running sum
                pltpu.VMEM((heads, Tq, Dh), jnp.float32),  # output accumulator
            ],
        ),
        compiler_params=pltpu.CompilerParams(
            dimension_semantics=("parallel", "arbitrary"),
            vmem_limit_bytes=VMEM_LIMIT_BYTES,
        ),
    )(q, k, v)


# ----------------------------------------------------------------------------
# The three attention processors (residual_connection=False,
# rescale_output_factor=1.0, no group_norm / spatial_norm / mask; dropout in
# to_out[1] is identity).  The block-level residual add is fused into to_out.
# ----------------------------------------------------------------------------
def mv_attn_processor(p, hidden, residual, num_views=NUM_VIEWS):
    """XFormersMVAttnProcessor (attn1): every view attends to all views of its
    group.  Equivalent to rearrange '(b t) d c -> b (t d) c' + my_repeat, but
    the replication lives purely in the kv index_map."""
    B, T, C = hidden.shape
    q, k, v = linear_fused(hidden, p["qkv_w"], p["qkv_b"], 3)
    tk = _pick_tile(T)
    tiles_per_view = T // tk

    def kv_map(b, kt):
        return ((b // num_views) * num_views + kt // tiles_per_view,
                kt % tiles_per_view)

    attn_out = flash_attention(
        q, k, v, heads=p["heads"], scale=p["scale"],
        kv_batch_seq_map=kv_map, n_kv_tiles=num_views * tiles_per_view, tk=tk)
    return linear(attn_out, p["o_w"], p["o_b"], residual=residual)


def cross_attn_processor(p, hidden, encoder_hidden_states, residual):
    """NewXFormersAttnProcessor (attn2): cross-attention over encoder states."""
    q = linear(hidden, p["q_w"], p["q_b"])
    k, v = linear_fused(encoder_hidden_states, p["kv_w"], p["kv_b"], 2)
    Tk = encoder_hidden_states.shape[1]
    tk = _pick_tile(Tk)

    def kv_map(b, kt):
        return (b, kt)

    attn_out = flash_attention(
        q, k, v, heads=p["heads"], scale=p["scale"],
        kv_batch_seq_map=kv_map, n_kv_tiles=Tk // tk, tk=tk)
    return linear(attn_out, p["o_w"], p["o_b"], residual=residual)


def joint_attn_processor(p, hidden, residual, num_tasks=2):
    """XFormersJointAttnProcessor: chunk/cat joint attention — query batch b
    attends to [key[b % half] ; key[b % half + half]] along the sequence, again
    expressed via the kv index_map instead of torch.cat."""
    assert num_tasks == 2
    B, T, C = hidden.shape
    q, k, v = linear_fused(hidden, p["qkv_w"], p["qkv_b"], 3)
    half = B // 2
    tk = _pick_tile(T)
    tiles_per_half = T // tk

    def kv_map(b, kt):
        return (b % half + half * (kt // tiles_per_half), kt % tiles_per_half)

    attn_out = flash_attention(
        q, k, v, heads=p["heads"], scale=p["scale"],
        kv_batch_seq_map=kv_map, n_kv_tiles=2 * tiles_per_half, tk=tk)
    return linear(attn_out, p["o_w"], p["o_b"], residual=residual)


# ----------------------------------------------------------------------------
# Minimal synthetic UNet routing through the three processors.
# TODO(synk): the full UNet2DConditionModel backbone (resnets, up/down blocks,
# group norms) is not reproduced — only the attention-processor compute the
# wrapper replaces plus the residual-injection semantics of its forward.
# ----------------------------------------------------------------------------
def timestep_embedding(timesteps, dim):
    half = dim // 2
    freqs = jnp.exp(-math.log(10000.0) * jnp.arange(half, dtype=jnp.float32) / half)
    args = timesteps.astype(jnp.float32)[:, None] * freqs[None, :]
    return jnp.concatenate([jnp.sin(args), jnp.cos(args)], axis=-1)


def unet_forward(params, sample, timestep, encoder_hidden_states,
                 down_block_additional_residuals=None,
                 mid_block_additional_residual=None):
    B, Cin, H, W = sample.shape

    if down_block_additional_residuals is not None:
        for res in down_block_additional_residuals:
            sample = sample + res  # already cast to weight dtype by the wrapper

    # conv_in as a 1x1 conv == per-pixel linear over channels (NCHW -> tokens)
    hidden = sample.reshape(B, Cin, H * W).transpose(0, 2, 1)           # (B,T,Cin)
    hidden = linear(hidden, params["conv_in_w"], params["conv_in_b"])   # (B,T,C)

    # timestep embedding MLP, broadcast over tokens
    t_emb = timestep_embedding(timestep, params["hidden_dim"])
    t_emb = linear(t_emb, params["time_w1"], params["time_b1"])
    t_emb = jax.nn.silu(t_emb)
    t_emb = linear(t_emb, params["time_w2"], params["time_b2"])
    hidden = hidden + t_emb[:, None, :]

    # transformer block with the swapped-in processors (residual add fused
    # into each processor's output projection)
    hidden = mv_attn_processor(params["attn1"], hidden, residual=hidden,
                               num_views=NUM_VIEWS)
    hidden = cross_attn_processor(params["attn2"], hidden,
                                  encoder_hidden_states, residual=hidden)

    if mid_block_additional_residual is not None:
        hidden = hidden + mid_block_additional_residual

    hidden = joint_attn_processor(params["attn_joint"], hidden, residual=hidden)

    # conv_out back to NCHW
    out = linear(hidden, params["conv_out_w"], params["conv_out_b"])
    Cout = out.shape[-1]
    return out.transpose(0, 2, 1).reshape(B, Cout, H, W)


class RefOnlyNoisedUNetPallas:
    """JAX/Pallas counterpart of RefOnlyNoisedUNet.forward (delegation + casts).
    TODO(synk): attack_mode's ref_dict capture of raw attention probabilities is
    not implemented (debug-only path)."""

    def __init__(self, params, dtype=jnp.float32):
        self.params = params
        self.dtype = dtype  # self.unet.dtype

    def __call__(self, sample, timestep, encoder_hidden_states, class_labels=None,
                 *, cross_attention_kwargs=None, down_block_res_samples=None,
                 mid_block_res_sample=None, attack_mode=False, **kwargs):
        wd = self.dtype
        down = ([s.astype(wd) for s in down_block_res_samples]
                if down_block_res_samples is not None else None)
        mid = (mid_block_res_sample.astype(wd)
               if mid_block_res_sample is not None else None)
        return unet_forward(self.params, sample, timestep,
                            encoder_hidden_states.astype(wd),
                            down_block_additional_residuals=down,
                            mid_block_additional_residual=mid)


# ----------------------------------------------------------------------------
# Deterministic parameter initialization (QKV / KV weights stored pre-fused)
# ----------------------------------------------------------------------------
def _init_self_attn(key, dim, heads):
    ks = jax.random.split(key, 2)
    s = 0.02
    dh = dim // heads
    return {
        "heads": heads,
        "scale": dh ** -0.5,
        "qkv_w": s * jax.random.normal(ks[0], (dim, 3 * dim), jnp.float32),
        "qkv_b": jnp.zeros((3 * dim,), jnp.float32),
        "o_w": s * jax.random.normal(ks[1], (dim, dim), jnp.float32),
        "o_b": jnp.zeros((dim,), jnp.float32),
    }


def _init_cross_attn(key, dim, enc_dim, heads):
    ks = jax.random.split(key, 3)
    s = 0.02
    dh = dim // heads
    return {
        "heads": heads,
        "scale": dh ** -0.5,
        "q_w": s * jax.random.normal(ks[0], (dim, dim), jnp.float32),
        "q_b": jnp.zeros((dim,), jnp.float32),
        "kv_w": s * jax.random.normal(ks[1], (enc_dim, 2 * dim), jnp.float32),
        "kv_b": jnp.zeros((2 * dim,), jnp.float32),
        "o_w": s * jax.random.normal(ks[2], (dim, dim), jnp.float32),
        "o_b": jnp.zeros((dim,), jnp.float32),
    }


def init_params(key, c_in, c_out, hidden, heads, enc_dim):
    ks = jax.random.split(key, 8)
    s = 0.02
    return {
        "hidden_dim": hidden,
        "conv_in_w": s * jax.random.normal(ks[0], (c_in, hidden), jnp.float32),
        "conv_in_b": jnp.zeros((hidden,), jnp.float32),
        "conv_out_w": s * jax.random.normal(ks[1], (hidden, c_out), jnp.float32),
        "conv_out_b": jnp.zeros((c_out,), jnp.float32),
        "time_w1": s * jax.random.normal(ks[2], (hidden, hidden), jnp.float32),
        "time_b1": jnp.zeros((hidden,), jnp.float32),
        "time_w2": s * jax.random.normal(ks[3], (hidden, hidden), jnp.float32),
        "time_b2": jnp.zeros((hidden,), jnp.float32),
        "attn1": _init_self_attn(ks[4], hidden, heads),
        "attn2": _init_cross_attn(ks[5], hidden, enc_dim, heads),
        "attn_joint": _init_self_attn(ks[6], hidden, heads),
    }


if __name__ == "__main__":
    key = jax.random.PRNGKey(0)
    k_sample, k_enc, k_down, k_mid, k_params = jax.random.split(key, 5)

    # Small shapes consistent with the module: batch = b * num_views = 1*6 = 6
    B, C_IN, H, W = 6, 4, 8, 8
    HIDDEN, HEADS = 32, 2
    ENC_SEQ, ENC_DIM = 8, 32
    T = H * W

    params = init_params(k_params, C_IN, C_IN, HIDDEN, HEADS, ENC_DIM)
    model = RefOnlyNoisedUNetPallas(params)

    sample = jax.random.normal(k_sample, (B, C_IN, H, W), jnp.float32)      # NCHW
    timestep = jnp.full((B,), 10.0, jnp.float32)
    encoder_hidden_states = jax.random.normal(k_enc, (B, ENC_SEQ, ENC_DIM),
                                              jnp.float32)
    down_block_res_samples = [
        jax.random.normal(k_down, (B, C_IN, H, W), jnp.float32)
    ]
    mid_block_res_sample = jax.random.normal(k_mid, (B, T, HIDDEN), jnp.float32)

    out = model(sample, timestep, encoder_hidden_states,
                cross_attention_kwargs={},
                down_block_res_samples=down_block_res_samples,
                mid_block_res_sample=mid_block_res_sample)
    out = jax.block_until_ready(out)
    assert out.shape == (B, C_IN, H, W)
    assert bool(jnp.all(jnp.isfinite(out)))
    print("KERNEL_OK")
</pallas_src>

<mosaic_0001>
module attributes {stable_mosaic.version = 11 : i64} {
  func.func @_linear_kernel(%arg0: i32, %arg1: i32, %arg2: memref<128x4xf32, #tpu.memory_space<vmem>>, %arg3: memref<4x32xf32, #tpu.memory_space<vmem>>, %arg4: memref<1x32xf32, #tpu.memory_space<vmem>>, %arg5: memref<128x32xf32, #tpu.memory_space<vmem>>) attributes {dimension_semantics = [#tpu.dimension_semantics<parallel>, #tpu.dimension_semantics<parallel>], iteration_bounds = array<i64: 3, 1>, scalar_prefetch = 0 : i64, scratch_operands = 0 : i64, tpu.core_type = #tpu.core_type<tc>, window_params = [{transform_indices = @transform_0, window_bounds = array<i64: 128, 4>}, {transform_indices = @transform_1, window_bounds = array<i64: 4, 32>}, {transform_indices = @transform_2, window_bounds = array<i64: 1, 32>}, {transform_indices = @transform_3, window_bounds = array<i64: 128, 32>}]} {
    %c0 = arith.constant 0 : index
    %c0_0 = arith.constant 0 : index
    %0 = vector.load %arg2[%c0, %c0_0] : memref<128x4xf32, #tpu.memory_space<vmem>>, vector<128x4xf32>
    %1 = arith.truncf %0 : vector<128x4xf32> to vector<128x4xbf16>
    %c0_1 = arith.constant 0 : index
    %c0_2 = arith.constant 0 : index
    %2 = vector.load %arg3[%c0_1, %c0_2] : memref<4x32xf32, #tpu.memory_space<vmem>>, vector<4x32xf32>
    %3 = arith.truncf %2 : vector<4x32xf32> to vector<4x32xbf16>
    %cst = arith.constant dense<0.000000e+00> : vector<128x32xf32>
    %4 = tpu.matmul %1, %3, %cst {dimension_numbers = #tpu.dot_dimension_numbers<[1], [0], [0], [1], [0, 0, 1, 1], [], []>} : vector<128x4xbf16>, vector<4x32xbf16>, vector<128x32xf32> -> vector<128x32xf32>
    %c0_3 = arith.constant 0 : index
    %c0_4 = arith.constant 0 : index
    %5 = vector.load %arg4[%c0_3, %c0_4] : memref<1x32xf32, #tpu.memory_space<vmem>>, vector<1x32xf32>
    %6 = vector.broadcast %5 : vector<1x32xf32> to vector<128x32xf32>
    %7 = arith.addf %4, %6 : vector<128x32xf32>
    %c0_5 = arith.constant 0 : index
    %c0_6 = arith.constant 0 : index
    %8 = vector.load %arg5[%c0_5, %c0_6] : memref<128x32xf32, #tpu.memory_space<vmem>>, vector<128x32xf32>
    tpu.vector_store %arg5[%c0_5, %c0_6], %7 {strides = array<i32>} : memref<128x32xf32, #tpu.memory_space<vmem>>, vector<128x32xf32>,
    return
  }
  func.func @transform_0(%arg0: i32, %arg1: i32) -> (i32, i32) {
    %c0_i32 = arith.constant 0 : i32
    %c0_i32_0 = arith.constant 0 : i32
    return %arg0, %c0_i32 : i32, i32
  }
  func.func @transform_1(%arg0: i32, %arg1: i32) -> (i32, i32) {
    %c0_i32 = arith.constant 0 : i32
    %c0_i32_0 = arith.constant 0 : i32
    return %c0_i32, %arg1 : i32, i32
  }
  func.func @transform_2(%arg0: i32, %arg1: i32) -> (i32, i32) {
    %c0_i32 = arith.constant 0 : i32
    %c0_i32_0 = arith.constant 0 : i32
    return %c0_i32, %arg1 : i32, i32
  }
  func.func @transform_3(%arg0: i32, %arg1: i32) -> (i32, i32) {
    %c0_i32 = arith.constant 0 : i32
    return %arg0, %arg1 : i32, i32
  }
}

</mosaic_0001>

<llo_original>
// kernel: tpu_custom_call.1
$region0: #{tpu_custom_call.1}
  #allocation0 [shape = 'u32[]', space=smem, size = 0x4, offset = 0x4, fixed_abs, tag = 'smem constant byte address 0x4 - core index']
  #allocation1 [shape = 'u32[72,128]{1,0:T(1,128)}', space=vmem, size = 0x9000, scoped, tag = 'internal scratch']
  %s0 = inlined_call_operand.vmem [shape: f32[384,4], index: 0, kind: input, shape index: {}]
  %s1 = inlined_call_operand.vmem [shape: f32[4,32], index: 1, kind: input, shape index: {}]
  %s2 = inlined_call_operand.vmem [shape: f32[1,32], index: 2, kind: input, shape index: {}]
  %s3 = inlined_call_operand.vmem [shape: f32[384,32], index: 3, kind: output, shape index: {}]
  %s4 = sld [smem:[#allocation0]]
  $region45: #{tpu_custom_call.1} parent=0
    _
  %s6 = ssub.s32 1, %s4
  %s7 = scalar_select 0, %s6, %s4
  loop: start=0, step=1, limit=5
  $region2: #{tpu_custom_call.1} parent=0 // loop_pre_header
    _
  $region3: #{tpu_custom_call.1} parent=0 // loop_header
    %s9 = sphi 0, %s13
    %p10 = scmp.ge.s32.totalorder %s9, 5
    %s16 = sphi 0, %s28
    %s17 = sphi 0, %s24
    %s18 = sphi 0, %s16
    %s19 = sphi 0, %s17
    %s20 = sphi 0, %s18
    %s21 = sphi 0, %s19
    %s31 = sphi 0, %s33
    %s34 = sphi 0, %s31
    %s35 = sphi 0, %s34
    %s51 = sphi 0, %s35
    %s57 = sphi 0, %s59
    %s60 = sphi 0, %s57
    %s61 = sphi 0, %s60
    %s77 = sphi 0, %s61
    %s83 = sphi 0, %s85
    %s86 = sphi 0, %s83
    %s87 = sphi 0, %s86
    %s103 = sphi 0, %s87
    %s111 = sphi 0, %s113
    %s114 = sphi 0, %s111
    %s115 = sphi 0, %s114
    %s131 = sphi 0, %s115
  $region4: #{tpu_custom_call.1} parent=0 // loop_header_branch
    %12 = sbr.rel (%p10) target = $region8
  $region5: #{tpu_custom_call.1} parent=0 // loop_body
    %s14 = ssub.s32 %s9, 1
    %s15 = ssub.s32 %s9, 2
    %s22 = sadd.s32 1, %s17
    %p23 = scmp.ge.s32.totalorder %s22, 1
    %s24 = scalar_select %p23, 0, %s22
    %s25 = sadd.s32 1, %s16
    %s26 = scalar_select %p23, %s25, %s16
    %p27 = scmp.ge.s32.totalorder %s26, 3
    %s28 = scalar_select %p27, 0, %s26
    %s29 = ssub.s32 %s16, %s28
    %p30 = scmp.eq.s32.totalorder %s29, 0
    %s32 = sadd.s32 %s31, 1
    %s33 = scalar_select %p30, %s31, %s32
    %p36 = pneg %p30
    %p37 = scmp.eq.s32.totalorder %s9, 2
    %p38 = por %p36, %p37
    %p39 = scmp.ne.s32.totalorder %s31, %s34
    %p40 = scmp.eq.s32.totalorder %s9, 0
    %p41 = por %p39, %p40
    %p42 = scmp.ne.s32.totalorder %s31, %s34
    %p43 = scmp.eq.s32.totalorder %s14, 2
    %p44 = por %p42, %p43
    %p45 = scmp.ne.s32.totalorder %s34, %s35
    %p46 = scmp.eq.s32.totalorder %s14, 0
    %p47 = por %p45, %p46
    %p48 = scmp.ne.s32.totalorder %s34, %s35
    %p49 = scmp.eq.s32.totalorder %s15, 2
    %p50 = por %p48, %p49
    %p52 = scmp.ne.s32.totalorder %s35, %s51
    %p53 = scmp.eq.s32.totalorder %s15, 0
    %p54 = por %p52, %p53
    %s55 = ssub.s32 %s17, %s24
    %p56 = scmp.eq.s32.totalorder %s55, 0
    %s58 = sadd.s32 %s57, 1
    %s59 = scalar_select %p56, %s57, %s58
    %p62 = pneg %p56
    %p63 = scmp.eq.s32.totalorder %s9, 2
    %p64 = por %p62, %p63
    %p65 = scmp.ne.s32.totalorder %s57, %s60
    %p66 = scmp.eq.s32.totalorder %s9, 0
    %p67 = por %p65, %p66
    %p68 = scmp.ne.s32.totalorder %s57, %s60
    %p69 = scmp.eq.s32.totalorder %s14, 2
    %p70 = por %p68, %p69
    %p71 = scmp.ne.s32.totalorder %s60, %s61
    %p72 = scmp.eq.s32.totalorder %s14, 0
    %p73 = por %p71, %p72
    %p74 = scmp.ne.s32.totalorder %s60, %s61
    %p75 = scmp.eq.s32.totalorder %s15, 2
    %p76 = por %p74, %p75
    %p78 = scmp.ne.s32.totalorder %s61, %s77
    %p79 = scmp.eq.s32.totalorder %s15, 0
    %p80 = por %p78, %p79
    %s81 = ssub.s32 %s17, %s24
    %p82 = scmp.eq.s32.totalorder %s81, 0
    %s84 = sadd.s32 %s83, 1
    %s85 = scalar_select %p82, %s83, %s84
    %p88 = pneg %p82
    %p89 = scmp.eq.s32.totalorder %s9, 2
    %p90 = por %p88, %p89
    %p91 = scmp.ne.s32.totalorder %s83, %s86
    %p92 = scmp.eq.s32.totalorder %s9, 0
    %p93 = por %p91, %p92
    %p94 = scmp.ne.s32.totalorder %s83, %s86
    %p95 = scmp.eq.s32.totalorder %s14, 2
    %p96 = por %p94, %p95
    %p97 = scmp.ne.s32.totalorder %s86, %s87
    %p98 = scmp.eq.s32.totalorder %s14, 0
    %p99 = por %p97, %p98
    %p100 = scmp.ne.s32.totalorder %s86, %s87
    %p101 = scmp.eq.s32.totalorder %s15, 2
    %p102 = por %p100, %p101
    %p104 = scmp.ne.s32.totalorder %s87, %s103
    %p105 = scmp.eq.s32.totalorder %s15, 0
    %p106 = por %p104, %p105
    %s107 = ssub.s32 %s16, %s28
    %s108 = ssub.s32 %s17, %s24
    %s109 = sor.u32 %s107, %s108
    %p110 = scmp.eq.s32.totalorder %s109, 0
    %s112 = sadd.s32 %s111, 1
    %s113 = scalar_select %p110, %s111, %s112
    %p116 = pneg %p110
    %p117 = scmp.eq.s32.totalorder %s9, 2
    %p118 = por %p116, %p117
    %p119 = scmp.ne.s32.totalorder %s111, %s114
    %p120 = scmp.eq.s32.totalorder %s9, 0
    %p121 = por %p119, %p120
    %p122 = scmp.ne.s32.totalorder %s111, %s114
    %p123 = scmp.eq.s32.totalorder %s14, 2
    %p124 = por %p122, %p123
    %p125 = scmp.ne.s32.totalorder %s114, %s115
    %p126 = scmp.eq.s32.totalorder %s14, 0
    %p127 = por %p125, %p126
    %p128 = scmp.ne.s32.totalorder %s114, %s115
    %p129 = scmp.eq.s32.totalorder %s15, 2
    %p130 = por %p128, %p129
    %p132 = scmp.ne.s32.totalorder %s115, %s131
    %p133 = scmp.eq.s32.totalorder %s15, 0
    %p134 = por %p132, %p133
    %p135 = scmp.le.s32.totalorder 1, %s9
    %p136 = scmp.lt.s32.totalorder %s9, 4
    %p137 = pnand %p135, %p136
    %p138 = pneg %p137
    // Predicated region
    $region9: #{tpu_custom_call.1} parent=5 // pred_check
      _
    $region10: #{tpu_custom_call.1} parent=5 // pred_check_branch
      %140 = sbr.rel (%p137) target = $region12
    $region11: #{tpu_custom_call.1} parent=5 // pred_region
      %s141 = ssub.s32 %s9, 1
      // Predicated region
      $region13: #{tpu_custom_call.1} parent=11 // pred_check
        %p142 = pneg %p73
      $region14: #{tpu_custom_call.1} parent=11 // pred_check_branch
        %144 = sbr.rel (%p142) target = $region16
      $region15: #{tpu_custom_call.1} parent=11 // pred_region
        %p145 = scmp.lt.s32.totalorder %s19, 0
        %s146 = scalar_select %p145, %s19, 0
        %s147 = smul.addr %s146, 4
        %s148 = scalar_lea.vmem %s1, %s147
      $region16: #{tpu_custom_call.1} parent=11 // pred_fallthru
        _
      // Predicated region
      $region17: #{tpu_custom_call.1} parent=11 // pred_check
        %p149 = pneg %p99
      $region18: #{tpu_custom_call.1} parent=11 // pred_check_branch
        %151 = sbr.rel (%p149) target = $region20
      $region19: #{tpu_custom_call.1} parent=11 // pred_region
        %p152 = scmp.lt.s32.totalorder %s19, 0
        %s153 = scalar_select %p152, %s19, 0
        %s154 = scalar_lea.vmem %s2, %s153
      $region20: #{tpu_custom_call.1} parent=11 // pred_fallthru
        _
    $region12: #{tpu_custom_call.1} parent=5 // pred_fallthru
      _
    %p155 = scmp.lt.s32.totalorder %s9, 3
    // Predicated region
    $region21: #{tpu_custom_call.1} parent=5 // pred_check
      %p156 = pneg %p155
    $region22: #{tpu_custom_call.1} parent=5 // pred_check_branch
      %158 = sbr.rel (%p156) target = $region24
    $region23: #{tpu_custom_call.1} parent=5 // pred_region
      // Predicated region
      $region25: #{tpu_custom_call.1} parent=23 // pred_check
        %p159 = pneg %p41
      $region26: #{tpu_custom_call.1} parent=23 // pred_check_branch
        %161 = sbr.rel (%p159) target = $region28
      $region27: #{tpu_custom_call.1} parent=23 // pred_region
        %s162 = smul.u32 16, %s16
        %p163 = scmp.lt.s32.totalorder %s162, 47
        %s164 = scalar_select %p163, %s162, 47
        %s165 = smul.addr %s164, 8
        %s166 = scalar_lea.vmem %s0, %s165
        %s167 = smul.u32 16, %s16
      $region28: #{tpu_custom_call.1} parent=23 // pred_fallthru
        _
    $region24: #{tpu_custom_call.1} parent=5 // pred_fallthru
      _
    %p168 = scmp.le.s32.totalorder 1, %s9
    %p169 = scmp.lt.s32.totalorder %s9, 4
    %p170 = pnand %p168, %p169
    %p171 = pneg %p170
    // Predicated region
    $region29: #{tpu_custom_call.1} parent=5 // pred_check
      _
    $region30: #{tpu_custom_call.1} parent=5 // pred_check_branch
      %173 = sbr.rel (%p170) target = $region32
    $region31: #{tpu_custom_call.1} parent=5 // pred_region
      %s174 = ssub.s32 %s9, 1
      %s175 = smul.u32 16, %s18
      %p176 = scmp.lt.s32.totalorder %s175, 47
      %s177 = scalar_select %p176, %s175, 47
      %s178 = smul.addr %s177, 8
      %s179 = scalar_lea.vmem %s0, %s178
      %p180 = pneg %p47
      %p181 = pneg %p44
      %p182 = scmp.lt.s32.totalorder %s19, 0
      %s183 = scalar_select %p182, %s19, 0
      %s184 = smul.addr %s183, 4
      %s185 = scalar_lea.vmem %s1, %s184
      %p186 = pneg %p73
      %p187 = pneg %p70
      %p188 = scmp.lt.s32.totalorder %s19, 0
      %s189 = scalar_select %p188, %s19, 0
      %s190 = scalar_lea.vmem %s2, %s189
      %p191 = pneg %p99
      %p192 = pneg %p96
      %p193 = pneg %p127
      %p194 = pneg %p124
      %s195 = smul.u32 16, %s18
      %p196 = scmp.lt.s32.totalorder %s195, 47
      %s197 = scalar_select %p196, %s195, 47
      %p198 = scmp.lt.s32.totalorder %s19, 0
      %s199 = scalar_select %p198, %s19, 0
      %s200 = sadd.s32 %s199, %s197
      %s201 = smul.addr %s200, 8
      %s202 = scalar_lea.vmem %s3, %s201
      %s203 = smul.u32 16, %s18
      %p204 = scmp.lt.s32.totalorder %s203, 47
      %s205 = scalar_select %p204, %s203, 47
      %s206 = smul.addr %s205, 8
      %s207 = scalar_lea.vmem %s0, %s206
      %s208 = smul.u32 16, %s18
      %p209 = scmp.lt.s32.totalorder %s19, 0
      %s210 = scalar_select %p209, %s19, 0
      %s211 = smul.addr %s210, 4
      %s212 = scalar_lea.vmem %s1, %s211
      %p213 = scmp.lt.s32.totalorder %s19, 0
      %s214 = scalar_select %p213, %s19, 0
      %s215 = scalar_lea.vmem %s2, %s214
      %s216 = smul.u32 16, %s18
      %p217 = scmp.lt.s32.totalorder %s216, 47
      %s218 = scalar_select %p217, %s216, 47
      %p219 = scmp.lt.s32.totalorder %s19, 0
      %s220 = scalar_select %p219, %s19, 0
      %s221 = sadd.s32 %s220, %s218
      %s222 = smul.addr %s221, 8
      %s223 = scalar_lea.vmem %s3, %s222
      %s224 = smul.u32 16, %s18
      %v226 = vld [vmem:[%s207] sm:$0xff]
      %v227 = vld [vmem:[%s207 + $0x8] sm:$0xff]
      %v228 = vld [vmem:[%s207 + $0x10] sm:$0xff]
      %v229 = vld [vmem:[%s207 + $0x18] sm:$0xff]
      %v230 = vld [vmem:[%s207 + $0x20] sm:$0xff]
      %v231 = vld [vmem:[%s207 + $0x28] sm:$0xff]
      %v232 = vld [vmem:[%s207 + $0x30] sm:$0xff]
      %v233 = vld [vmem:[%s207 + $0x38] sm:$0xff]
      %v234 = vld [vmem:[%s207 + $0x40] sm:$0xff]
      %v235 = vld [vmem:[%s207 + $0x48] sm:$0xff]
      %v236 = vld [vmem:[%s207 + $0x50] sm:$0xff]
      %v237 = vld [vmem:[%s207 + $0x58] sm:$0xff]
      %v238 = vld [vmem:[%s207 + $0x60] sm:$0xff]
      %v239 = vld [vmem:[%s207 + $0x68] sm:$0xff]
      %v240 = vld [vmem:[%s207 + $0x70] sm:$0xff]
      %v241 = vld [vmem:[%s207 + $0x78] sm:$0xff]
      %v242 = vpack.c.bf16 %v227, %v226
      %v243 = vpack.c.bf16 %v229, %v228
      %v244 = vpack.c.bf16 %v231, %v230
      %v245 = vpack.c.bf16 %v233, %v232
      %v246 = vpack.c.bf16 %v235, %v234
      %v247 = vpack.c.bf16 %v237, %v236
      %v248 = vpack.c.bf16 %v239, %v238
      %v249 = vpack.c.bf16 %v241, %v240
      %v250 = vld [vmem:[%s212] sm:$0xf]
      %v251 = vpack.c.bf16 %v250, %v250
      %v252 = vld [vmem:[%s215] sm:$0x1]
      %v254 = vperm.slane %v252, 0
      %vm256 = vcmask 31744
      %v258 = vsel %vm256, %v242, 0
      %v261 = vsel %vm256, %v243, 0
      %v264 = vsel %vm256, %v244, 0
      %v267 = vsel %vm256, %v245, 0
      %v270 = vsel %vm256, %v246, 0
      %v273 = vsel %vm256, %v247, 0
      %v276 = vsel %vm256, %v248, 0
      %v279 = vsel %vm256, %v249, 0
      %vm281 = vcmask 1041408
      %v283 = vsel %vm281, %v251, 0
      %285 = vmatpush.bf16.msra.mxu0 0
      %286 = vmatpush.bf16.msra.mxu0 0
      %287 = vmatpush.bf16.msra.mxu0 0
      %288 = vmatpush.bf16.msra.mxu0 0
      %289 = vmatpush.bf16.msra.mxu0 0
      %290 = vmatpush.bf16.msra.mxu0 0
      %291 = vmatpush.bf16.msra.mxu0 0
      %292 = vmatpush.bf16.msra.mxu0 %v283
      %293 = vmatmul.bf16.gmra.mxu0 %v258
      %v294 = vpop.f32.mrf.mxu0
      %v295 = vadd.f32 %v254, %v294
      %v296 = vpop.f32.mrf.mxu0
      %v297 = vadd.f32 %v254, %v296
      %298 = vmatmul.bf16.gmra.mxu0 %v261
      %v299 = vpop.f32.mrf.mxu0
      %v300 = vadd.f32 %v254, %v299
      %v301 = vpop.f32.mrf.mxu0
      %v302 = vadd.f32 %v254, %v301
      %303 = vmatmul.bf16.gmra.mxu0 %v264
      %v304 = vpop.f32.mrf.mxu0
      %v305 = vadd.f32 %v254, %v304
      %v306 = vpop.f32.mrf.mxu0
      %v307 = vadd.f32 %v254, %v306
      %308 = vmatmul.bf16.gmra.mxu0 %v267
      %v309 = vpop.f32.mrf.mxu0
      %v310 = vadd.f32 %v254, %v309
      %v311 = vpop.f32.mrf.mxu0
      %v312 = vadd.f32 %v254, %v311
      %313 = vmatmul.bf16.gmra.mxu0 %v270
      %v314 = vpop.f32.mrf.mxu0
      %v315 = vadd.f32 %v254, %v314
      %v316 = vpop.f32.mrf.mxu0
      %v317 = vadd.f32 %v254, %v316
      %318 = vmatmul.bf16.gmra.mxu0 %v273
      %v319 = vpop.f32.mrf.mxu0
      %v320 = vadd.f32 %v254, %v319
      %v321 = vpop.f32.mrf.mxu0
      %v322 = vadd.f32 %v254, %v321
      %323 = vmatmul.bf16.gmra.mxu0 %v276
      %v324 = vpop.f32.mrf.mxu0
      %v325 = vadd.f32 %v254, %v324
      %v326 = vpop.f32.mrf.mxu0
      %v327 = vadd.f32 %v254, %v326
      %328 = vmatmul.bf16.gmra.mxu0 %v279
      %v329 = vpop.f32.mrf.mxu0
      %v330 = vadd.f32 %v254, %v329
      %v331 = vpop.f32.mrf.mxu0
      %v332 = vadd.f32 %v254, %v331
      %333 = vdwg.mxu0
      %vm334 = vcmask 261120
      %335 = vst.msk [vmem:[%s223] sm:$0xff] %vm334, %v295
      %336 = vst.msk [vmem:[%s223 + $0x8] sm:$0xff] %vm334, %v297
      %337 = vst.msk [vmem:[%s223 + $0x10] sm:$0xff] %vm334, %v300
      %338 = vst.msk [vmem:[%s223 + $0x18] sm:$0xff] %vm334, %v302
      %339 = vst.msk [vmem:[%s223 + $0x20] sm:$0xff] %vm334, %v305
      %340 = vst.msk [vmem:[%s223 + $0x28] sm:$0xff] %vm334, %v307
      %341 = vst.msk [vmem:[%s223 + $0x30] sm:$0xff] %vm334, %v310
      %342 = vst.msk [vmem:[%s223 + $0x38] sm:$0xff] %vm334, %v312
      %343 = vst.msk [vmem:[%s223 + $0x40] sm:$0xff] %vm334, %v315
      %344 = vst.msk [vmem:[%s223 + $0x48] sm:$0xff] %vm334, %v317
      %345 = vst.msk [vmem:[%s223 + $0x50] sm:$0xff] %vm334, %v320
      %346 = vst.msk [vmem:[%s223 + $0x58] sm:$0xff] %vm334, %v322
      %347 = vst.msk [vmem:[%s223 + $0x60] sm:$0xff] %vm334, %v325
      %348 = vst.msk [vmem:[%s223 + $0x68] sm:$0xff] %vm334, %v327
      %349 = vst.msk [vmem:[%s223 + $0x70] sm:$0xff] %vm334, %v330
      %350 = vst.msk [vmem:[%s223 + $0x78] sm:$0xff] %vm334, %v332
      %s351 = smul.u32 16, %s18
      %p352 = scmp.lt.s32.totalorder %s351, 47
      %s353 = scalar_select %p352, %s351, 47
      %p354 = scmp.lt.s32.totalorder %s19, 0
      %s355 = scalar_select %p354, %s19, 0
      %s356 = sadd.s32 %s355, %s353
      %s357 = smul.addr %s356, 8
      %s358 = scalar_lea.vmem %s3, %s357
      // Predicated region
      $region33: #{tpu_custom_call.1} parent=31 // pred_check
        %p359 = pneg %p124
      $region34: #{tpu_custom_call.1} parent=31 // pred_check_branch
        %361 = sbr.rel (%p359) target = $region36
      $region35: #{tpu_custom_call.1} parent=31 // pred_region
        %s362 = smul.u32 16, %s18
      $region36: #{tpu_custom_call.1} parent=31 // pred_fallthru
        _
    $region32: #{tpu_custom_call.1} parent=5 // pred_fallthru
      _
    %p363 = scmp.le.s32.totalorder 2, %s9
    // Predicated region
    $region37: #{tpu_custom_call.1} parent=5 // pred_check
      %p364 = pneg %p363
    $region38: #{tpu_custom_call.1} parent=5 // pred_check_branch
      %366 = sbr.rel (%p364) target = $region40
    $region39: #{tpu_custom_call.1} parent=5 // pred_region
      %s367 = ssub.s32 %s9, 2
      // Predicated region
      $region41: #{tpu_custom_call.1} parent=39 // pred_check
        %p368 = pneg %p130
      $region42: #{tpu_custom_call.1} parent=39 // pred_check_branch
        %370 = sbr.rel (%p368) target = $region44
      $region43: #{tpu_custom_call.1} parent=39 // pred_region
        %s371 = smul.u32 16, %s20
        %p372 = scmp.lt.s32.totalorder %s371, 47
        %s373 = scalar_select %p372, %s371, 47
        %p374 = scmp.lt.s32.totalorder %s21, 0
        %s375 = scalar_select %p374, %s21, 0
        %s376 = sadd.s32 %s375, %s373
        %s377 = smul.addr %s376, 8
        %s378 = scalar_lea.vmem %s3, %s377
      $region44: #{tpu_custom_call.1} parent=39 // pred_fallthru
        _
    $region40: #{tpu_custom_call.1} parent=5 // pred_fallthru
      _
  $region6: #{tpu_custom_call.1} parent=0 // loop_footer
    %s13 = sadd.s32 1, %s9
  $region7: #{tpu_custom_call.1} parent=0 // loop_footer_branch
    %8 = sbr.rel target = $region3
  $region8: #{tpu_custom_call.1} parent=0 // loop_exit
    _

</llo_original>
